<compile_context>
chip_gen: v6e
topology: v6e:2x2x1
jax: 0.10.0
libtpu: 0.0.40
codegen_flags: <defaults>
</compile_context>

<pallas_src>
import jax
import jax.numpy as jnp
import numpy as np
from jax.experimental import pallas as pl
from jax.experimental.pallas import tpu as pltpu


# ---- fused-sincos constants: range reduction by pi/2 with a Cody-Waite split ----
_TWO_OVER_PI = np.float32(2.0 / np.pi)
# pi/2 with the low 3 mantissa bits zeroed -> q * _PI2_HI is exact for |q| <= 8.
_PI2_HI = np.float32(1.57079601287841796875)
_PI2_LO = np.float32(np.pi / 2.0 - 1.57079601287841796875)


def _make_kernel(r, c):
    """Build the kernel with r (radius) and c = 2*pi/round(N) baked in as constants."""
    r = np.float32(r)
    c = np.float32(c)

    def kernel(params_ref, idx_ref, x_out_ref, y_out_ref):
        # params_ref : VMEM (TS, 3)  -> columns [x0, y0, alpha_rad]
        # idx_ref    : VMEM (TS, TH) -> hole indices (int16 or float32)
        x0 = params_ref[:, 0:1]          # (TS, 1), broadcast across lanes
        y0 = params_ref[:, 1:2]
        alpha_rad = params_ref[:, 2:3]

        idx = idx_ref[...].astype(jnp.float32)
        # phase = 2*pi*(idx - 1)/round(N) + deg2rad(alpha); (idx - 1) is exact in f32.
        phase = (idx - 1.0) * c + alpha_rad

        # ---- fused sincos: one shared range reduction, two polynomials ----
        q = jnp.floor(phase * _TWO_OVER_PI + 0.5)       # nearest multiple of pi/2
        rr = (phase - q * _PI2_HI) - q * _PI2_LO         # reduced arg, |rr| <= pi/4
        z = rr * rr
        # Cephes sinf / cosf minimax polynomials, valid on [-pi/4, pi/4].
        sin_p = ((-1.9515295891e-4 * z + 8.3321608736e-3) * z
                 - 1.6666654611e-1) * z * rr + rr
        cos_p = ((2.443315711809948e-5 * z - 1.388731625493765e-3) * z
                 + 4.166664568298827e-2) * (z * z) - 0.5 * z + 1.0

        k = jnp.bitwise_and(q.astype(jnp.int32), 3)      # quadrant in {0,1,2,3}
        swap = jnp.bitwise_and(k, 1) == 1
        sin_v = jnp.where(swap, cos_p, sin_p)
        cos_v = jnp.where(swap, sin_p, cos_p)
        sin_v = jnp.where(jnp.bitwise_and(k, 2) == 2, -sin_v, sin_v)
        cos_v = jnp.where(jnp.bitwise_and(k + 1, 2) == 2, -cos_v, cos_v)

        x_out_ref[...] = x0 + r * cos_v
        y_out_ref[...] = y0 + r * sin_v

    return kernel


def antikythera_forward(hole_idx, x0, y0, alpha, r, N_float, *,
                        vmem_budget_bytes=8 * 1024 * 1024, lane_tile=1024):
    """hole_idx: (S, H) hole indices (int or float); x0/y0/alpha: (S,) per-section
    parameters; r, N_float: STATIC Python/numpy scalars (folded at trace time).

    Returns (x_pred, y_pred), each (S, H) float32.
    """
    S, H = hole_idx.shape

    # Static scalar algebra done once at trace time (round(N)==0 raises here).
    r = float(r)
    N = float(np.round(float(N_float)))
    c = 2.0 * np.pi / N

    alpha_rad = jnp.asarray(alpha, jnp.float32) * jnp.float32(np.pi / 180.0)
    params = jnp.stack([jnp.asarray(x0, jnp.float32),
                        jnp.asarray(y0, jnp.float32),
                        alpha_rad], axis=1)                      # (S, 3): one DMA stream

    hole_idx = jnp.asarray(hole_idx)
    if jnp.issubdtype(hole_idx.dtype, jnp.integer):
        # Hole indices are bounded by round(N) (a few hundred) -> exact in int16;
        # halves streamed input bytes (biggest help on HBM-bound v5e).
        hole_idx = hole_idx.astype(jnp.int16)
    else:
        hole_idx = hole_idx.astype(jnp.float32)
    idx_bytes = hole_idx.dtype.itemsize

    # ---- 2-D (row x lane) tiling from a VMEM byte budget ----
    # Double-buffered streamed bytes per tile ~= 2*(idx + x_out + y_out)
    #   = 2*(idx_bytes + 8) * TS * TH.
    lane_tile = max(128, (int(lane_tile) // 128) * 128)
    if H <= lane_tile:
        TH, nh = H, 1                      # full lane extent: any H allowed
    else:
        TH = lane_tile                     # multiple of 128; partial edge block OK
        nh = pl.cdiv(H, TH)
    bytes_per_row = 2 * (idx_bytes + 8) * TH
    ts_budget = max(16, (int(vmem_budget_bytes) // bytes_per_row) // 16 * 16)
    if S <= ts_budget:
        TS, ns = S, 1                      # full row extent: any S allowed
    else:
        TS = int(ts_budget)                # multiple of 16 (f32 8-row / i16 16-row tiles)
        ns = pl.cdiv(S, TS)
    grid = (ns, nh)

    out_shape = (jax.ShapeDtypeStruct((S, H), jnp.float32),
                 jax.ShapeDtypeStruct((S, H), jnp.float32))

    # TODO(synk): for parameter-sweep fitting loops, batch candidate parameter
    #             sets as an extra leading "parallel" grid axis in ONE pallas_call
    #             instead of one call per candidate (launch overhead dominates
    #             at tiny per-candidate sizes).
    x_pred, y_pred = pl.pallas_call(
        _make_kernel(r, c),
        out_shape=out_shape,
        grid=grid,
        in_specs=[
            pl.BlockSpec((TS, 3), lambda i, j: (i, 0)),    # packed section params
            pl.BlockSpec((TS, TH), lambda i, j: (i, j)),   # hole indices
        ],
        out_specs=(pl.BlockSpec((TS, TH), lambda i, j: (i, j)),
                   pl.BlockSpec((TS, TH), lambda i, j: (i, j))),
        compiler_params=pltpu.CompilerParams(
            dimension_semantics=("parallel", "parallel")),  # shards across v7x's 2 TCs
    )(params, hole_idx)

    return x_pred, y_pred


if __name__ == "__main__":
    # ---- deterministic parameter init (mirrors AntikytheraModel.__init__) ----
    section_ids = [0, 1, 2, 3]          # S = 4 sections
    S = len(section_ids)
    r = 77.0
    N_float = 354.0
    x0 = jnp.array([80.0 + i for i in range(S)], dtype=jnp.float32)
    y0 = jnp.array([136.0 + 0.5 * i for i in range(S)], dtype=jnp.float32)
    alpha = jnp.array([-145.0 - 0.5 * i for i in range(S)], dtype=jnp.float32)

    # ---- deterministic example input: lane-dense 128 hole indices per section ----
    H = 128
    key = jax.random.PRNGKey(0)
    hole_idx = jax.random.randint(key, (S, H), 1, int(round(N_float)) + 1,
                                  dtype=jnp.int32)

    # ---- run the Pallas kernel ----
    x_pred, y_pred = antikythera_forward(hole_idx, x0, y0, alpha, r, N_float)
    jax.block_until_ready((x_pred, y_pred))

    # ---- reference check: float64 numpy mirror of the PyTorch forward ----
    Nr = np.round(N_float)
    hi = np.asarray(hole_idx, dtype=np.float64)
    theta = 2.0 * np.pi * (hi - 1.0) / Nr
    phase = theta + np.asarray(alpha, dtype=np.float64)[:, None] * (np.pi / 180.0)
    x_ref = np.asarray(x0, dtype=np.float64)[:, None] + r * np.cos(phase)
    y_ref = np.asarray(y0, dtype=np.float64)[:, None] + r * np.sin(phase)
    np.testing.assert_allclose(np.asarray(x_pred), x_ref, rtol=1e-5, atol=1e-3)
    np.testing.assert_allclose(np.asarray(y_pred), y_ref, rtol=1e-5, atol=1e-3)

    print("KERNEL_OK")
</pallas_src>

<mosaic_0001>
module attributes {stable_mosaic.version = 11 : i64} {
  func.func @kernel(%arg0: i32, %arg1: i32, %arg2: memref<4x3xf32, #tpu.memory_space<vmem>>, %arg3: memref<4x128xi16, #tpu.memory_space<vmem>>, %arg4: memref<4x128xf32, #tpu.memory_space<vmem>>, %arg5: memref<4x128xf32, #tpu.memory_space<vmem>>) attributes {dimension_semantics = [#tpu.dimension_semantics<parallel>, #tpu.dimension_semantics<parallel>], iteration_bounds = array<i64: 1, 1>, scalar_prefetch = 0 : i64, scratch_operands = 0 : i64, tpu.core_type = #tpu.core_type<tc>, window_params = [{transform_indices = @transform_0, window_bounds = array<i64: 4, 3>}, {transform_indices = @transform_1, window_bounds = array<i64: 4, 128>}, {transform_indices = @transform_2, window_bounds = array<i64: 4, 128>}, {transform_indices = @transform_3, window_bounds = array<i64: 4, 128>}]} {
    %c0 = arith.constant 0 : index
    %c0_0 = arith.constant 0 : index
    %0 = vector.load %arg2[%c0, %c0_0] : memref<4x3xf32, #tpu.memory_space<vmem>>, vector<4x1xf32>
    %c0_1 = arith.constant 0 : index
    %c1 = arith.constant 1 : index
    %1 = vector.load %arg2[%c0_1, %c1] : memref<4x3xf32, #tpu.memory_space<vmem>>, vector<4x1xf32>
    %c0_2 = arith.constant 0 : index
    %c2 = arith.constant 2 : index
    %2 = vector.load %arg2[%c0_2, %c2] : memref<4x3xf32, #tpu.memory_space<vmem>>, vector<4x1xf32>
    %c0_3 = arith.constant 0 : index
    %c0_4 = arith.constant 0 : index
    %3 = vector.load %arg3[%c0_3, %c0_4] : memref<4x128xi16, #tpu.memory_space<vmem>>, vector<4x128xi16>
    %4 = arith.sitofp %3 : vector<4x128xi16> to vector<4x128xf32>
    %cst = arith.constant 1.000000e+00 : f32
    %5 = vector.broadcast %cst : f32 to vector<4x128xf32>
    %6 = arith.subf %4, %5 : vector<4x128xf32>
    %cst_5 = arith.constant 0.0177491102 : f32
    %7 = vector.broadcast %cst_5 : f32 to vector<4x128xf32>
    %8 = arith.mulf %6, %7 : vector<4x128xf32>
    %9 = vector.broadcast %2 : vector<4x1xf32> to vector<4x128xf32>
    %10 = arith.addf %8, %9 : vector<4x128xf32>
    %cst_6 = arith.constant 0.636619746 : f32
    %11 = vector.broadcast %cst_6 : f32 to vector<4x128xf32>
    %12 = arith.mulf %10, %11 : vector<4x128xf32>
    %cst_7 = arith.constant 5.000000e-01 : f32
    %13 = vector.broadcast %cst_7 : f32 to vector<4x128xf32>
    %14 = arith.addf %12, %13 : vector<4x128xf32>
    %15 = math.floor %14 : vector<4x128xf32>
    %cst_8 = arith.constant 1.57079601 : f32
    %16 = vector.broadcast %cst_8 : f32 to vector<4x128xf32>
    %17 = arith.mulf %15, %16 : vector<4x128xf32>
    %18 = arith.subf %10, %17 : vector<4x128xf32>
    %cst_9 = arith.constant 3.13916473E-7 : f32
    %19 = vector.broadcast %cst_9 : f32 to vector<4x128xf32>
    %20 = arith.mulf %15, %19 : vector<4x128xf32>
    %21 = arith.subf %18, %20 : vector<4x128xf32>
    %22 = arith.mulf %21, %21 : vector<4x128xf32>
    %cst_10 = arith.constant -1.95152956E-4 : f32
    %23 = vector.broadcast %cst_10 : f32 to vector<4x128xf32>
    %24 = arith.mulf %23, %22 : vector<4x128xf32>
    %cst_11 = arith.constant 0.00833216123 : f32
    %25 = vector.broadcast %cst_11 : f32 to vector<4x128xf32>
    %26 = arith.addf %24, %25 : vector<4x128xf32>
    %27 = arith.mulf %26, %22 : vector<4x128xf32>
    %cst_12 = arith.constant 0.166666552 : f32
    %28 = vector.broadcast %cst_12 : f32 to vector<4x128xf32>
    %29 = arith.subf %27, %28 : vector<4x128xf32>
    %30 = arith.mulf %29, %22 : vector<4x128xf32>
    %31 = arith.mulf %30, %21 : vector<4x128xf32>
    %32 = arith.addf %31, %21 : vector<4x128xf32>
    %cst_13 = arith.constant 2.44331568E-5 : f32
    %33 = vector.broadcast %cst_13 : f32 to vector<4x128xf32>
    %34 = arith.mulf %33, %22 : vector<4x128xf32>
    %cst_14 = arith.constant 0.00138873165 : f32
    %35 = vector.broadcast %cst_14 : f32 to vector<4x128xf32>
    %36 = arith.subf %34, %35 : vector<4x128xf32>
    %37 = arith.mulf %36, %22 : vector<4x128xf32>
    %cst_15 = arith.constant 0.0416666456 : f32
    %38 = vector.broadcast %cst_15 : f32 to vector<4x128xf32>
    %39 = arith.addf %37, %38 : vector<4x128xf32>
    %40 = arith.mulf %22, %22 : vector<4x128xf32>
    %41 = arith.mulf %39, %40 : vector<4x128xf32>
    %cst_16 = arith.constant 5.000000e-01 : f32
    %42 = vector.broadcast %cst_16 : f32 to vector<4x128xf32>
    %43 = arith.mulf %42, %22 : vector<4x128xf32>
    %44 = arith.subf %41, %43 : vector<4x128xf32>
    %cst_17 = arith.constant 1.000000e+00 : f32
    %45 = vector.broadcast %cst_17 : f32 to vector<4x128xf32>
    %46 = arith.addf %44, %45 : vector<4x128xf32>
    %47 = arith.fptosi %15 : vector<4x128xf32> to vector<4x128xi32>
    %c3_i32 = arith.constant 3 : i32
    %48 = vector.broadcast %c3_i32 : i32 to vector<4x128xi32>
    %49 = arith.andi %47, %48 : vector<4x128xi32>
    %c1_i32 = arith.constant 1 : i32
    %50 = vector.broadcast %c1_i32 : i32 to vector<4x128xi32>
    %51 = arith.andi %49, %50 : vector<4x128xi32>
    %c1_i32_18 = arith.constant 1 : i32
    %52 = vector.broadcast %c1_i32_18 : i32 to vector<4x128xi32>
    %53 = arith.cmpi eq, %51, %52 : vector<4x128xi32>
    %54 = arith.select %53, %46, %32 : vector<4x128xi1>, vector<4x128xf32>
    %55 = arith.select %53, %32, %46 : vector<4x128xi1>, vector<4x128xf32>
    %c2_i32 = arith.constant 2 : i32
    %56 = vector.broadcast %c2_i32 : i32 to vector<4x128xi32>
    %57 = arith.andi %49, %56 : vector<4x128xi32>
    %c2_i32_19 = arith.constant 2 : i32
    %58 = vector.broadcast %c2_i32_19 : i32 to vector<4x128xi32>
    %59 = arith.cmpi eq, %57, %58 : vector<4x128xi32>
    %cst_20 = arith.constant 0.000000e+00 : f32
    %60 = vector.broadcast %cst_20 : f32 to vector<4x128xf32>
    %61 = arith.subf %60, %54 : vector<4x128xf32>
    %62 = arith.select %59, %61, %54 : vector<4x128xi1>, vector<4x128xf32>
    %c1_i32_21 = arith.constant 1 : i32
    %63 = vector.broadcast %c1_i32_21 : i32 to vector<4x128xi32>
    %64 = arith.addi %49, %63 : vector<4x128xi32>
    %c2_i32_22 = arith.constant 2 : i32
    %65 = vector.broadcast %c2_i32_22 : i32 to vector<4x128xi32>
    %66 = arith.andi %64, %65 : vector<4x128xi32>
    %c2_i32_23 = arith.constant 2 : i32
    %67 = vector.broadcast %c2_i32_23 : i32 to vector<4x128xi32>
    %68 = arith.cmpi eq, %66, %67 : vector<4x128xi32>
    %cst_24 = arith.constant 0.000000e+00 : f32
    %69 = vector.broadcast %cst_24 : f32 to vector<4x128xf32>
    %70 = arith.subf %69, %55 : vector<4x128xf32>
    %71 = arith.select %68, %70, %55 : vector<4x128xi1>, vector<4x128xf32>
    %cst_25 = arith.constant 7.700000e+01 : f32
    %72 = vector.broadcast %cst_25 : f32 to vector<4x128xf32>
    %73 = arith.mulf %72, %71 : vector<4x128xf32>
    %74 = vector.broadcast %0 : vector<4x1xf32> to vector<4x128xf32>
    %75 = arith.addf %74, %73 : vector<4x128xf32>
    %c0_26 = arith.constant 0 : index
    %c0_27 = arith.constant 0 : index
    %76 = vector.load %arg4[%c0_26, %c0_27] : memref<4x128xf32, #tpu.memory_space<vmem>>, vector<4x128xf32>
    tpu.vector_store %arg4[%c0_26, %c0_27], %75 {strides = array<i32>} : memref<4x128xf32, #tpu.memory_space<vmem>>, vector<4x128xf32>,
    %cst_28 = arith.constant 7.700000e+01 : f32
    %77 = vector.broadcast %cst_28 : f32 to vector<4x128xf32>
    %78 = arith.mulf %77, %62 : vector<4x128xf32>
    %79 = vector.broadcast %1 : vector<4x1xf32> to vector<4x128xf32>
    %80 = arith.addf %79, %78 : vector<4x128xf32>
    %c0_29 = arith.constant 0 : index
    %c0_30 = arith.constant 0 : index
    %81 = vector.load %arg5[%c0_29, %c0_30] : memref<4x128xf32, #tpu.memory_space<vmem>>, vector<4x128xf32>
    tpu.vector_store %arg5[%c0_29, %c0_30], %80 {strides = array<i32>} : memref<4x128xf32, #tpu.memory_space<vmem>>, vector<4x128xf32>,
    return
  }
  func.func @transform_0(%arg0: i32, %arg1: i32) -> (i32, i32) {
    %c0_i32 = arith.constant 0 : i32
    %c0_i32_0 = arith.constant 0 : i32
    return %arg0, %c0_i32 : i32, i32
  }
  func.func @transform_1(%arg0: i32, %arg1: i32) -> (i32, i32) {
    %c0_i32 = arith.constant 0 : i32
    return %arg0, %arg1 : i32, i32
  }
  func.func @transform_2(%arg0: i32, %arg1: i32) -> (i32, i32) {
    %c0_i32 = arith.constant 0 : i32
    return %arg0, %arg1 : i32, i32
  }
  func.func @transform_3(%arg0: i32, %arg1: i32) -> (i32, i32) {
    %c0_i32 = arith.constant 0 : i32
    return %arg0, %arg1 : i32, i32
  }
}

</mosaic_0001>

<llo_original>
// kernel: tpu_custom_call.1
$region0: #{tpu_custom_call.1}
  #allocation0 [shape = 'u32[]', space=smem, size = 0x4, offset = 0x4, fixed_abs, tag = 'smem constant byte address 0x4 - core index']
  #allocation1 [shape = 'u32[144,128]{1,0:T(1,128)}', space=vmem, size = 0x12000, scoped, tag = 'internal scratch']
  %s0 = inlined_call_operand.hbm [shape: f32[4,3], index: 0, kind: input, shape index: {}]
  %s1 = inlined_call_operand.hbm [shape: s16[4,128], index: 1, kind: input, shape index: {}]
  %s2 = inlined_call_operand.hbm [shape: f32[4,128], index: 2, kind: output, shape index: {0}]
  %s3 = inlined_call_operand.hbm [shape: f32[4,128], index: 3, kind: output, shape index: {1}]
  %4 = xla_tuple %s2, %s3
  %s5 = sld [smem:[#allocation0]]
  $region34: #{tpu_custom_call.1} parent=0
    _
  %s7 = ssub.s32 1, %s5
  %s8 = scalar_select 0, %s7, %s5
  $region1: #{tpu_custom_call.1} parent=0
    #allocation2 [shape = 'u8[2048]{0}', space=vmem, size = 0x800, scoped, tag = 'input window, operand 0, single buffered']
    #allocation3 [shape = 's32[1]{0}', space=sflag, size = 0x4, scoped, tag = 'scoped memory for tpu_custom_call.1']
    #allocation4 [shape = 's32[1]{0}', space=sflag, size = 0x4, scoped, tag = 'scoped memory for tpu_custom_call.1']
    #allocation5 [shape = 'u8[1024]{0}', space=vmem, size = 0x400, scoped, tag = 'input window, operand 1, single buffered']
    #allocation6 [shape = 's32[1]{0}', space=sflag, size = 0x4, scoped, tag = 'scoped memory for tpu_custom_call.1']
    #allocation7 [shape = 'u8[2048]{0}', space=vmem, size = 0x800, scoped, tag = 'output window, operand 0, single buffered']
    #allocation8 [shape = 'u8[2048]{0}', space=vmem, size = 0x800, scoped, tag = 'output window, operand 1, single buffered']
    #allocation9 [shape = 's32[1]{0}', space=sflag, size = 0x4, scoped, tag = 'scoped memory for tpu_custom_call.1']
    %9 = vsyncpa [#allocation3], 0
    %10 = vsyncpa [#allocation6], 0
    %11 = vsyncpa [#allocation4], 0
    %12 = vsyncpa [#allocation9], 0
    // Predicated region
    $region2: #{tpu_custom_call.1} parent=1 // pred_check
      _
    $region3: #{tpu_custom_call.1} parent=1 // pred_check_branch
      %14 = sbr.rel (0) target = $region5
    $region4: #{tpu_custom_call.1} parent=1 // pred_region
      %s16 = ssub.s32 64, 64
      %17 = vsyncadd [#allocation3], %s16
      %s19 = sshll.u32 [#allocation2], 4
      %s20 = int_to_ptr.vmem [resolvable:$true] %s19
      %22 = dma.hbm_to_vmem [thread:$0]  %s0, 64, %s20, [#allocation3]
    $region5: #{tpu_custom_call.1} parent=1 // pred_fallthru
      _
    // Predicated region
    $region6: #{tpu_custom_call.1} parent=1 // pred_check
      _
    $region7: #{tpu_custom_call.1} parent=1 // pred_check_branch
      %24 = sbr.rel (0) target = $region9
    $region8: #{tpu_custom_call.1} parent=1 // pred_region
      %s26 = ssub.s32 32, 32
      %27 = vsyncadd [#allocation6], %s26
      %s29 = sshll.u32 [#allocation5], 4
      %s30 = int_to_ptr.vmem [resolvable:$true] %s29
      %32 = dma.hbm_to_vmem [thread:$0]  %s1, 32, %s30, [#allocation6]
    $region9: #{tpu_custom_call.1} parent=1 // pred_fallthru
      _
    // Predicated region
    $region10: #{tpu_custom_call.1} parent=1 // pred_check
      _
    $region11: #{tpu_custom_call.1} parent=1 // pred_check_branch
      %34 = sbr.rel (0) target = $region13
    $region12: #{tpu_custom_call.1} parent=1 // pred_region
      %35 = dma.done [#allocation3], 64
    $region13: #{tpu_custom_call.1} parent=1 // pred_fallthru
      _
    // Predicated region
    $region14: #{tpu_custom_call.1} parent=1 // pred_check
      _
    $region15: #{tpu_custom_call.1} parent=1 // pred_check_branch
      %37 = sbr.rel (0) target = $region17
    $region16: #{tpu_custom_call.1} parent=1 // pred_region
      %38 = dma.done [#allocation6], 32
    $region17: #{tpu_custom_call.1} parent=1 // pred_fallthru
      _
    %v39 = vld [vmem:[#allocation2] sm:$0xf]
    %v40 = vld [vmem:[#allocation5] sm:$0x3]
    %v41 = vunpack.c.l.b16 %v40
    %v42 = vcvt.s32.f32 %v41
    %v43 = vsub.f32 %v42, 1.0
    %v44 = vmul.f32 %v43, 0.01774911
    %46 = vset.pattern.permute.xlu0 2
    %47 = vperm.xlu0 %46, %v39
    %v48 = vpop.permute.xlu0 %47
    %v50 = vadd.f32 %v44, %v48
    %v51 = vmul.f32 %v50, 0.63661975
    %v52 = vadd.f32 %v51, 0.5
    %v53 = vfloor.f32 %v52
    %v54 = vmul.f32 %v53, 1.570796
    %v55 = vsub.f32 %v50, %v54
    %v56 = vmul.f32 %v53, 3.1391647e-07
    %v57 = vsub.f32 %v55, %v56
    %v58 = vmul.f32 %v57, %v57
    %v59 = vmul.f32 %v58, -0.00019515296
    %v60 = vadd.f32 %v59, 0.008332161
    %v61 = vmul.f32 %v60, %v58
    %v62 = vsub.f32 %v61, 0.16666655
    %v63 = vmul.f32 %v62, %v58
    %v64 = vmul.f32 %v63, %v57
    %v65 = vadd.f32 %v64, %v57
    %v66 = vmul.f32 %v58, 2.4433157e-05
    %v67 = vsub.f32 %v66, 0.0013887316
    %v68 = vmul.f32 %v67, %v58
    %v69 = vadd.f32 %v68, 0.041666646
    %v70 = vmul.f32 %v58, %v58
    %v71 = vmul.f32 %v69, %v70
    %v72 = vmul.f32 %v58, 0.5
    %v73 = vsub.f32 %v71, %v72
    %v74 = vadd.f32 %v73, 1.0
    %v75 = vcvt.f32.s32.to.zero.pseudo %v53
    %v76 = vand.u32 %v75, 3
    %v77 = vand.u32 %v76, 1
    %vm78 = vcmp.eq.s32.totalorder %v77, 1
    %v79 = vsel %vm78, %v74, %v65
    %v80 = vsel %vm78, %v65, %v74
    %v81 = vand.u32 %v76, 2
    %vm82 = vcmp.eq.s32.totalorder %v81, 2
    %v83 = vsub.f32 0.0, %v79
    %v84 = vsel %vm82, %v83, %v79
    %v85 = vadd.s32 %v76, 1
    %v86 = vand.u32 %v85, 2
    %vm87 = vcmp.eq.s32.totalorder %v86, 2
    %v88 = vsub.f32 0.0, %v80
    %v89 = vsel %vm87, %v88, %v80
    %v90 = vmul.f32 %v89, 77.0
    %91 = vset.pattern.permute.xlu0 0
    %92 = vperm.xlu0 %91, %v39
    %v93 = vpop.permute.xlu0 %92
    %v95 = vadd.f32 %v93, %v90
    %96 = vst [vmem:[#allocation7] sm:$0xf] %v95
    %v97 = vmul.f32 %v84, 77.0
    %98 = vset.pattern.permute.xlu0 1
    %99 = vperm.xlu0 %98, %v39
    %v100 = vpop.permute.xlu0 %99
    %v102 = vadd.f32 %v100, %v97
    %103 = vst [vmem:[#allocation8] sm:$0xf] %v102
    // Predicated region
    $region18: #{tpu_custom_call.1} parent=1 // pred_check
      _
    $region19: #{tpu_custom_call.1} parent=1 // pred_check_branch
      %105 = sbr.rel (0) target = $region21
    $region20: #{tpu_custom_call.1} parent=1 // pred_region
      %s107 = ssub.s32 64, 64
      %108 = vsyncadd [#allocation4], %s107
      %s110 = sshll.u32 [#allocation7], 4
      %s111 = int_to_ptr.vmem [resolvable:$true] %s110
      %113 = dma.vmem_to_hbm [thread:$0]  %s111, 64, %s2, [#allocation4]
    $region21: #{tpu_custom_call.1} parent=1 // pred_fallthru
      _
    // Predicated region
    $region22: #{tpu_custom_call.1} parent=1 // pred_check
      _
    $region23: #{tpu_custom_call.1} parent=1 // pred_check_branch
      %115 = sbr.rel (0) target = $region25
    $region24: #{tpu_custom_call.1} parent=1 // pred_region
      %s117 = ssub.s32 64, 64
      %118 = vsyncadd [#allocation9], %s117
      %s120 = sshll.u32 [#allocation8], 4
      %s121 = int_to_ptr.vmem [resolvable:$true] %s120
      %123 = dma.vmem_to_hbm [thread:$0]  %s121, 64, %s3, [#allocation9]
    $region25: #{tpu_custom_call.1} parent=1 // pred_fallthru
      _
    // Predicated region
    $region26: #{tpu_custom_call.1} parent=1 // pred_check
      _
    $region27: #{tpu_custom_call.1} parent=1 // pred_check_branch
      %125 = sbr.rel (0) target = $region29
    $region28: #{tpu_custom_call.1} parent=1 // pred_region
      %126 = dma.done [#allocation4], 64
    $region29: #{tpu_custom_call.1} parent=1 // pred_fallthru
      _
    // Predicated region
    $region30: #{tpu_custom_call.1} parent=1 // pred_check
      _
    $region31: #{tpu_custom_call.1} parent=1 // pred_check_branch
      %128 = sbr.rel (0) target = $region33
    $region32: #{tpu_custom_call.1} parent=1 // pred_region
      %129 = dma.done [#allocation9], 64
    $region33: #{tpu_custom_call.1} parent=1 // pred_fallthru
      _
    %130 = vsyncpa [#allocation3], 1
    %131 = vsyncpa [#allocation6], 1
    %132 = vsyncpa [#allocation4], 1
    %133 = vsyncpa [#allocation9], 1

</llo_original>
